<compile_context>
chip_gen: v7x
topology: tpu7x:2x2x1
jax: 0.10.0
libtpu: 0.0.40
codegen_flags: <defaults>
</compile_context>

<pallas_src>
import functools

import jax
import jax.numpy as jnp
from jax.experimental import pallas as pl
from jax.experimental.pallas import tpu as pltpu


_MASK_VALUE = -1e30


def _round_up(x: int, m: int) -> int:
    return (x + m - 1) // m * m


def _attention_kernel(q_ref, v_ref, o_ref, m_sc, l_sc, acc_sc,
                      *, kv_len, kv_len_padded, block_k, exact_recip):
    # q_ref: (bq, D)   v_ref: (bk, D)   o_ref: (bq, D)   (batch dim squeezed)
    kv = pl.program_id(2)

    @pl.when(kv == 0)
    def _init():
        m_sc[...] = jnp.full_like(m_sc, -jnp.inf)
        l_sc[...] = jnp.zeros_like(l_sc)
        acc_sc[...] = jnp.zeros_like(acc_sc)

    q = q_ref[...]          # native dtype straight to the MXU
    v = v_ref[...]

    # scores = Q @ V^T  -> (bq, bk), f32 accumulation on the MXU.
    s = jax.lax.dot_general(q, v, (((1,), (1,)), ((), ())),
                            preferred_element_type=jnp.float32)

    if kv_len != kv_len_padded:
        # Static branch: only emitted when the KV axis was padded. (1, bk)
        # mask broadcast by the select; only the last KV block can actually
        # contain padded keys (Svp - Sv < bk), and that block always holds
        # at least one valid key, so l never becomes zero.
        key_idx = kv * block_k + jax.lax.broadcasted_iota(
            jnp.int32, (1, block_k), 1)
        s = jnp.where(key_idx < kv_len, s, _MASK_VALUE)

    # Online-softmax update (f32 on VPU/EUP).
    m_prev = m_sc[...]
    m_new = jnp.maximum(m_prev, jnp.max(s, axis=-1, keepdims=True))
    alpha = jnp.exp(m_prev - m_new)
    p = jnp.exp(s - m_new)
    l_sc[...] = alpha * l_sc[...] + jnp.sum(p, axis=-1, keepdims=True)
    acc_sc[...] = alpha * acc_sc[...] + jax.lax.dot_general(
        p.astype(v.dtype), v, (((1,), (0,)), ((), ())),
        preferred_element_type=jnp.float32)
    m_sc[...] = m_new

    @pl.when(kv == pl.num_programs(2) - 1)
    def _finalize():
        if exact_recip:
            # Exact f32 normalization: approx reciprocal (~1e-3..1e-2 rel err)
            # is not acceptable for f32 outputs.
            out = acc_sc[...] / l_sc[...]
        else:
            out = acc_sc[...] * pl.reciprocal(l_sc[...], approx=True)
        o_ref[...] = out.astype(o_ref.dtype)


def simple_attention(query, value, *, block_q=512, block_k=1024):
    """softmax(query @ value^T, axis=-1) @ value, per batch element.

    query: (B, Sq, D), value: (B, Sv, D) -> context: (B, Sq, D)
    Matches the PyTorch module exactly (no 1/sqrt(D) scaling).
    """
    B, Sq, D = query.shape
    Bv, Sv, Dv = value.shape
    assert B == Bv and D == Dv

    dtype = jnp.dtype(query.dtype)
    itemsize = dtype.itemsize
    sublane = 16 if dtype == jnp.bfloat16 else 8

    # ---- Q tiling (full head dim is always the block's last dim: exempt
    #      from the 128-lane rule, so D is never padded). ----
    bq = Sq if Sq <= block_q else block_q
    # v7x megacore: expose >= 2 parallel blocks across (B, Sq tiles).
    if B * pl.cdiv(Sq, bq) < 2 and Sq >= 2 * sublane:
        bq = _round_up(pl.cdiv(Sq, 2), sublane)
    Sqp = _round_up(Sq, bq)

    # ---- KV tiling ----
    bk = Sv if Sv <= block_k else block_k
    Svp = _round_up(Sv, bk)

    q = query
    v = value
    if Sqp != Sq:
        q = jnp.pad(query, ((0, 0), (0, Sqp - Sq), (0, 0)))
    if Svp != Sv:
        v = jnp.pad(value, ((0, 0), (0, Svp - Sv), (0, 0)))

    grid = (B, Sqp // bq, Svp // bk)
    num_q_tiles = Sqp // bq

    kernel = functools.partial(
        _attention_kernel, kv_len=Sv, kv_len_padded=Svp, block_k=bk,
        exact_recip=(dtype == jnp.float32))

    cost = pl.CostEstimate(
        flops=4 * B * Sqp * Svp * D,
        transcendentals=B * Sqp * Svp,
        bytes_accessed=int(
            B * Sqp * D * itemsize                      # Q read
            + B * Sqp * D * itemsize                    # O write
            + num_q_tiles * B * Svp * D * itemsize),    # V re-streamed per Q tile
    )

    out = pl.pallas_call(
        kernel,
        out_shape=jax.ShapeDtypeStruct((B, Sqp, D), query.dtype),
        grid_spec=pltpu.PrefetchScalarGridSpec(
            num_scalar_prefetch=0,
            grid=grid,
            in_specs=[
                pl.BlockSpec((pl.Squeezed(), bq, D), lambda b, qi, ki: (b, qi, 0)),
                pl.BlockSpec((pl.Squeezed(), bk, D), lambda b, qi, ki: (b, ki, 0)),
            ],
            out_specs=pl.BlockSpec((pl.Squeezed(), bq, D),
                                   lambda b, qi, ki: (b, qi, 0)),
            scratch_shapes=[
                pltpu.VMEM((bq, 1), jnp.float32),    # running max  m
                pltpu.VMEM((bq, 1), jnp.float32),    # running sum  l
                pltpu.VMEM((bq, D), jnp.float32),    # f32 output accumulator
            ],
        ),
        compiler_params=pltpu.CompilerParams(
            dimension_semantics=("parallel", "parallel", "arbitrary"),
        ),
        cost_estimate=cost,
    )(q, v)

    if Sqp != Sq:
        out = out[:, :Sq, :]
    return out


def _reference(query, value):
    scores = jnp.einsum("bqd,bkd->bqk", query, value)
    weights = jax.nn.softmax(scores, axis=-1)
    return jnp.einsum("bqk,bkd->bqd", weights, value)


if __name__ == "__main__":
    key = jax.random.PRNGKey(0)
    kq, kv = jax.random.split(key)

    # Matches the PyTorch module's (batch, seq, dim) convention.
    B, Sq, Sv, D = 2, 8, 8, 32
    query = jax.random.normal(kq, (B, Sq, D), dtype=jnp.float32)
    value = jax.random.normal(kv, (B, Sv, D), dtype=jnp.float32)

    out = jax.jit(simple_attention)(query, value)
    out = jax.block_until_ready(out)

    ref = _reference(query, value)
    assert out.shape == (B, Sq, D)
    assert jnp.allclose(out, ref, atol=2e-5, rtol=2e-5), (
        float(jnp.max(jnp.abs(out - ref))))

    # Second check: exercises Q padding, the megacore split (B=1) and the
    # multi-KV-block online softmax + padding mask path.
    kq2, kv2 = jax.random.split(jax.random.PRNGKey(0), 2)
    B2, Sq2, Sv2, D2 = 1, 40, 1100, 32
    q2 = jax.random.normal(kq2, (B2, Sq2, D2), dtype=jnp.float32)
    v2 = jax.random.normal(kv2, (B2, Sv2, D2), dtype=jnp.float32)
    out2 = jax.block_until_ready(jax.jit(simple_attention)(q2, v2))
    ref2 = _reference(q2, v2)
    assert out2.shape == (B2, Sq2, D2)
    assert jnp.allclose(out2, ref2, atol=2e-5, rtol=2e-5), (
        float(jnp.max(jnp.abs(out2 - ref2))))

    print("KERNEL_OK")
</pallas_src>

<mosaic_0001>
module attributes {stable_mosaic.version = 11 : i64} {
  func.func @_attention_kernel(%arg0: i32, %arg1: i32, %arg2: i32, %arg3: memref<1x8x32xf32, #tpu.memory_space<vmem>>, %arg4: memref<1x8x32xf32, #tpu.memory_space<vmem>>, %arg5: memref<1x8x32xf32, #tpu.memory_space<vmem>>, %arg6: memref<8x1xf32, #tpu.memory_space<vmem>>, %arg7: memref<8x1xf32, #tpu.memory_space<vmem>>, %arg8: memref<8x32xf32, #tpu.memory_space<vmem>>) attributes {dimension_semantics = [#tpu.dimension_semantics<parallel>, #tpu.dimension_semantics<parallel>, #tpu.dimension_semantics<arbitrary>], iteration_bounds = array<i64: 2, 1, 1>, scalar_prefetch = 0 : i64, scratch_operands = 3 : i64, tpu.core_type = #tpu.core_type<tc>, window_params = [{transform_indices = @transform_0, window_bounds = array<i64: 1, 8, 32>}, {transform_indices = @transform_1, window_bounds = array<i64: 1, 8, 32>}, {transform_indices = @transform_2, window_bounds = array<i64: 1, 8, 32>}]} {
    %c0_i32 = arith.constant 0 : i32
    %0 = arith.cmpi eq, %arg2, %c0_i32 : i32
    %1 = arith.extui %0 : i1 to i32
    %c0_i32_0 = arith.constant 0 : i32
    %2 = arith.cmpi ne, %1, %c0_i32_0 : i32
    scf.if %2 {
      %cst_23 = arith.constant 0xFF800000 : f32
      %33 = vector.broadcast %cst_23 : f32 to vector<8x1xf32>
      %c0_24 = arith.constant 0 : index
      %c0_25 = arith.constant 0 : index
      %34 = vector.load %arg6[%c0_24, %c0_25] : memref<8x1xf32, #tpu.memory_space<vmem>>, vector<8x1xf32>
      tpu.vector_store %arg6[%c0_24, %c0_25], %33 {strides = array<i32>} : memref<8x1xf32, #tpu.memory_space<vmem>>, vector<8x1xf32>,
      %cst_26 = arith.constant 0.000000e+00 : f32
      %35 = vector.broadcast %cst_26 : f32 to vector<8x1xf32>
      %c0_27 = arith.constant 0 : index
      %c0_28 = arith.constant 0 : index
      %36 = vector.load %arg7[%c0_27, %c0_28] : memref<8x1xf32, #tpu.memory_space<vmem>>, vector<8x1xf32>
      tpu.vector_store %arg7[%c0_27, %c0_28], %35 {strides = array<i32>} : memref<8x1xf32, #tpu.memory_space<vmem>>, vector<8x1xf32>,
      %cst_29 = arith.constant 0.000000e+00 : f32
      %37 = vector.broadcast %cst_29 : f32 to vector<8x32xf32>
      %c0_30 = arith.constant 0 : index
      %c0_31 = arith.constant 0 : index
      %38 = vector.load %arg8[%c0_30, %c0_31] : memref<8x32xf32, #tpu.memory_space<vmem>>, vector<8x32xf32>
      tpu.vector_store %arg8[%c0_30, %c0_31], %37 {strides = array<i32>} : memref<8x32xf32, #tpu.memory_space<vmem>>, vector<8x32xf32>,
    } else {
    }
    %c0 = arith.constant 0 : index
    %c0_1 = arith.constant 0 : index
    %c0_2 = arith.constant 0 : index
    %3 = vector.load %arg3[%c0, %c0_1, %c0_2] : memref<1x8x32xf32, #tpu.memory_space<vmem>>, vector<1x8x32xf32>
    %4 = vector.shape_cast %3 : vector<1x8x32xf32> to vector<8x32xf32>
    %c0_3 = arith.constant 0 : index
    %c0_4 = arith.constant 0 : index
    %c0_5 = arith.constant 0 : index
    %5 = vector.load %arg4[%c0_3, %c0_4, %c0_5] : memref<1x8x32xf32, #tpu.memory_space<vmem>>, vector<1x8x32xf32>
    %6 = vector.shape_cast %5 : vector<1x8x32xf32> to vector<8x32xf32>
    %cst = arith.constant dense<0.000000e+00> : vector<8x8xf32>
    %7 = tpu.matmul %4, %6, %cst {dimension_numbers = #tpu.dot_dimension_numbers<[1], [1], [0], [0], [0, 0, 1, 0], [], []>} : vector<8x32xf32>, vector<8x32xf32>, vector<8x8xf32> -> vector<8x8xf32>
    %c0_6 = arith.constant 0 : index
    %c0_7 = arith.constant 0 : index
    %8 = vector.load %arg6[%c0_6, %c0_7] : memref<8x1xf32, #tpu.memory_space<vmem>>, vector<8x1xf32>
    %cst_8 = arith.constant dense<0xFF800000> : vector<8xf32>
    %9 = vector.multi_reduction <maximumf>, %7, %cst_8 [1] : vector<8x8xf32> to vector<8xf32>
    %10 = vector.shape_cast %9 : vector<8xf32> to vector<8x1xf32>
    %11 = arith.maximumf %8, %10 : vector<8x1xf32>
    %12 = arith.subf %8, %11 : vector<8x1xf32>
    %13 = math.exp %12 : vector<8x1xf32>
    %14 = vector.broadcast %11 : vector<8x1xf32> to vector<8x8xf32>
    %15 = arith.subf %7, %14 : vector<8x8xf32>
    %16 = math.exp %15 : vector<8x8xf32>
    %c0_9 = arith.constant 0 : index
    %c0_10 = arith.constant 0 : index
    %17 = vector.load %arg7[%c0_9, %c0_10] : memref<8x1xf32, #tpu.memory_space<vmem>>, vector<8x1xf32>
    %18 = arith.mulf %13, %17 : vector<8x1xf32>
    %cst_11 = arith.constant dense<0.000000e+00> : vector<8xf32>
    %19 = vector.multi_reduction <add>, %16, %cst_11 [1] : vector<8x8xf32> to vector<8xf32>
    %20 = vector.shape_cast %19 : vector<8xf32> to vector<8x1xf32>
    %21 = arith.addf %18, %20 : vector<8x1xf32>
    %c0_12 = arith.constant 0 : index
    %c0_13 = arith.constant 0 : index
    %22 = vector.load %arg7[%c0_12, %c0_13] : memref<8x1xf32, #tpu.memory_space<vmem>>, vector<8x1xf32>
    tpu.vector_store %arg7[%c0_12, %c0_13], %21 {strides = array<i32>} : memref<8x1xf32, #tpu.memory_space<vmem>>, vector<8x1xf32>,
    %c0_14 = arith.constant 0 : index
    %c0_15 = arith.constant 0 : index
    %23 = vector.load %arg8[%c0_14, %c0_15] : memref<8x32xf32, #tpu.memory_space<vmem>>, vector<8x32xf32>
    %24 = vector.broadcast %13 : vector<8x1xf32> to vector<8x32xf32>
    %25 = arith.mulf %24, %23 : vector<8x32xf32>
    %cst_16 = arith.constant dense<0.000000e+00> : vector<8x32xf32>
    %26 = tpu.matmul %16, %6, %cst_16 {dimension_numbers = #tpu.dot_dimension_numbers<[1], [0], [0], [1], [0, 0, 1, 1], [], []>} : vector<8x8xf32>, vector<8x32xf32>, vector<8x32xf32> -> vector<8x32xf32>
    %27 = arith.addf %25, %26 : vector<8x32xf32>
    %c0_17 = arith.constant 0 : index
    %c0_18 = arith.constant 0 : index
    %28 = vector.load %arg8[%c0_17, %c0_18] : memref<8x32xf32, #tpu.memory_space<vmem>>, vector<8x32xf32>
    tpu.vector_store %arg8[%c0_17, %c0_18], %27 {strides = array<i32>} : memref<8x32xf32, #tpu.memory_space<vmem>>, vector<8x32xf32>,
    %c0_19 = arith.constant 0 : index
    %c0_20 = arith.constant 0 : index
    %29 = vector.load %arg6[%c0_19, %c0_20] : memref<8x1xf32, #tpu.memory_space<vmem>>, vector<8x1xf32>
    tpu.vector_store %arg6[%c0_19, %c0_20], %11 {strides = array<i32>} : memref<8x1xf32, #tpu.memory_space<vmem>>, vector<8x1xf32>,
    %c0_i32_21 = arith.constant 0 : i32
    %30 = arith.cmpi eq, %arg2, %c0_i32_21 : i32
    %31 = arith.extui %30 : i1 to i32
    %c0_i32_22 = arith.constant 0 : i32
    %32 = arith.cmpi ne, %31, %c0_i32_22 : i32
    scf.if %32 {
      %c0_23 = arith.constant 0 : index
      %c0_24 = arith.constant 0 : index
      %33 = vector.load %arg8[%c0_23, %c0_24] : memref<8x32xf32, #tpu.memory_space<vmem>>, vector<8x32xf32>
      %c0_25 = arith.constant 0 : index
      %c0_26 = arith.constant 0 : index
      %34 = vector.load %arg7[%c0_25, %c0_26] : memref<8x1xf32, #tpu.memory_space<vmem>>, vector<8x1xf32>
      %35 = vector.broadcast %34 : vector<8x1xf32> to vector<8x32xf32>
      %36 = arith.divf %33, %35 : vector<8x32xf32>
      %c0_27 = arith.constant 0 : index
      %c0_28 = arith.constant 0 : index
      %c0_29 = arith.constant 0 : index
      %37 = vector.load %arg5[%c0_27, %c0_28, %c0_29] : memref<1x8x32xf32, #tpu.memory_space<vmem>>, vector<1x8x32xf32>
      %38 = vector.shape_cast %37 : vector<1x8x32xf32> to vector<8x32xf32>
      %39 = vector.shape_cast %36 : vector<8x32xf32> to vector<1x8x32xf32>
      tpu.vector_store %arg5[%c0_27, %c0_28, %c0_29], %39 {strides = array<i32>} : memref<1x8x32xf32, #tpu.memory_space<vmem>>, vector<1x8x32xf32>,
    } else {
    }
    return
  }
  func.func @transform_0(%arg0: i32, %arg1: i32, %arg2: i32) -> (i32, i32, i32) {
    %c0_i32 = arith.constant 0 : i32
    %c0_i32_0 = arith.constant 0 : i32
    return %arg0, %arg1, %c0_i32 : i32, i32, i32
  }
  func.func @transform_1(%arg0: i32, %arg1: i32, %arg2: i32) -> (i32, i32, i32) {
    %c0_i32 = arith.constant 0 : i32
    %c0_i32_0 = arith.constant 0 : i32
    return %arg0, %arg2, %c0_i32 : i32, i32, i32
  }
  func.func @transform_2(%arg0: i32, %arg1: i32, %arg2: i32) -> (i32, i32, i32) {
    %c0_i32 = arith.constant 0 : i32
    %c0_i32_0 = arith.constant 0 : i32
    return %arg0, %arg1, %c0_i32 : i32, i32, i32
  }
}

</mosaic_0001>

<llo_original>
// kernel: simple_attention.1
$region0: #{simple_attention.1}
  #allocation0 [shape = 'u32[]', space=smem, size = 0x4, offset = 0x4, fixed_abs, tag = 'smem constant byte address 0x4 - core index']
  #allocation1 [shape = 'u32[144,128]{1,0:T(1,128)}', space=vmem, size = 0x12000, scoped, tag = 'internal scratch']
  #allocation2 [shape = 'f32[8,1]{1,0:T(8,128)}', space=vmem, size = 0x1000, scoped, tag = 'scratch operand']
  #allocation3 [shape = 'f32[8,1]{1,0:T(8,128)}', space=vmem, size = 0x1000, scoped, tag = 'scratch operand']
  #allocation4 [shape = 'f32[8,32]{1,0:T(8,128)}', space=vmem, size = 0x1000, scoped, tag = 'scratch operand']
  %s0 = inlined_call_operand.hbm [shape: f32[2,8,32], index: 0, kind: input, shape index: {}]
  %s1 = inlined_call_operand.hbm [shape: f32[2,8,32], index: 1, kind: input, shape index: {}]
  %s2 = inlined_call_operand.hbm [shape: f32[2,8,32], index: 2, kind: output, shape index: {}]
  %s3 = sld [smem:[#allocation0]]
  $region57: #{simple_attention.1} parent=0
    _
  %s5 = ssub.s32 1, %s3
  %s6 = scalar_select 0, %s5, %s3
  $region1: #{simple_attention.1} parent=0
    #allocation5 [shape = 'u8[8192]{0}', space=vmem, size = 0x2000, scoped, tag = 'input window, operand 0']
    #allocation6 [shape = 's32[2]{0}', space=sflag, size = 0x8, scoped, tag = 'scoped memory for simple_attention.1']
    #allocation7 [shape = 's32[2]{0}', space=sflag, size = 0x8, scoped, tag = 'scoped memory for simple_attention.1']
    #allocation8 [shape = 'u8[8192]{0}', space=vmem, size = 0x2000, scoped, tag = 'input window, operand 1']
    #allocation9 [shape = 's32[2]{0}', space=sflag, size = 0x8, scoped, tag = 'scoped memory for simple_attention.1']
    #allocation10 [shape = 'u8[8192]{0}', space=vmem, size = 0x2000, scoped, tag = 'output window, operand 0']
    %7 = vsyncpa [#allocation6], 0
    %s8 = scalar_lea.sflag [#allocation6], 1
    %9 = vsyncpa %s8, 0
    %10 = vsyncpa [#allocation9], 0
    %s11 = scalar_lea.sflag [#allocation9], 1
    %12 = vsyncpa %s11, 0
    %13 = vsyncpa [#allocation7], 0
    %s14 = scalar_lea.sflag [#allocation7], 1
    %15 = vsyncpa %s14, 0
    loop: start=0, step=1, limit=4
    $region2: #{simple_attention.1} parent=1 // loop_pre_header
      _
    $region3: #{simple_attention.1} parent=1 // loop_header
      %s17 = sphi 0, %s21
      %p18 = scmp.ge.s32.totalorder %s17, 4
      %s24 = sphi 0, %s43
      %s25 = sphi 0, %s39
      %s26 = sphi 0, %s35
      %s27 = sphi 0, %s24
      %s28 = sphi 0, %s25
      %s29 = sphi 0, %s26
      %s30 = sphi 0, %s27
      %s31 = sphi 0, %s28
      %s32 = sphi 0, %s29
      %s48 = sphi 0, %s50
      %s51 = sphi 0, %s48
      %s52 = sphi 0, %s51
      %s68 = sphi 0, %s52
      %s76 = sphi 0, %s78
      %s79 = sphi 0, %s76
      %s80 = sphi 0, %s79
      %s96 = sphi 0, %s80
      %s104 = sphi 0, %s106
      %s107 = sphi 0, %s104
      %s108 = sphi 0, %s107
      %s124 = sphi 0, %s108
    $region4: #{simple_attention.1} parent=1 // loop_header_branch
      %20 = sbr.rel (%p18) target = $region8
    $region5: #{simple_attention.1} parent=1 // loop_body
      %s22 = ssub.s32 %s17, 1
      %s23 = ssub.s32 %s17, 2
      %s33 = sadd.s32 1, %s26
      %p34 = scmp.ge.s32.totalorder %s33, 1
      %s35 = scalar_select %p34, 0, %s33
      %s36 = sadd.s32 1, %s25
      %s37 = scalar_select %p34, %s36, %s25
      %p38 = scmp.ge.s32.totalorder %s37, 1
      %s39 = scalar_select %p38, 0, %s37
      %s40 = sadd.s32 1, %s24
      %s41 = scalar_select %p38, %s40, %s24
      %p42 = scmp.ge.s32.totalorder %s41, 2
      %s43 = scalar_select %p42, 0, %s41
      %s44 = ssub.s32 %s24, %s43
      %s45 = ssub.s32 %s25, %s39
      %s46 = sor.u32 %s44, %s45
      %p47 = scmp.eq.s32.totalorder %s46, 0
      %s49 = sadd.s32 %s48, 1
      %s50 = scalar_select %p47, %s48, %s49
      %p53 = pneg %p47
      %p54 = scmp.eq.s32.totalorder %s17, 1
      %p55 = por %p53, %p54
      %p56 = scmp.ne.s32.totalorder %s48, %s51
      %p57 = scmp.eq.s32.totalorder %s17, 0
      %p58 = por %p56, %p57
      %p59 = scmp.ne.s32.totalorder %s48, %s51
      %p60 = scmp.eq.s32.totalorder %s22, 1
      %p61 = por %p59, %p60
      %p62 = scmp.ne.s32.totalorder %s51, %s52
      %p63 = scmp.eq.s32.totalorder %s22, 0
      %p64 = por %p62, %p63
      %p65 = scmp.ne.s32.totalorder %s51, %s52
      %p66 = scmp.eq.s32.totalorder %s23, 1
      %p67 = por %p65, %p66
      %p69 = scmp.ne.s32.totalorder %s52, %s68
      %p70 = scmp.eq.s32.totalorder %s23, 0
      %p71 = por %p69, %p70
      %s72 = ssub.s32 %s24, %s43
      %s73 = ssub.s32 %s26, %s35
      %s74 = sor.u32 %s72, %s73
      %p75 = scmp.eq.s32.totalorder %s74, 0
      %s77 = sadd.s32 %s76, 1
      %s78 = scalar_select %p75, %s76, %s77
      %p81 = pneg %p75
      %p82 = scmp.eq.s32.totalorder %s17, 1
      %p83 = por %p81, %p82
      %p84 = scmp.ne.s32.totalorder %s76, %s79
      %p85 = scmp.eq.s32.totalorder %s17, 0
      %p86 = por %p84, %p85
      %p87 = scmp.ne.s32.totalorder %s76, %s79
      %p88 = scmp.eq.s32.totalorder %s22, 1
      %p89 = por %p87, %p88
      %p90 = scmp.ne.s32.totalorder %s79, %s80
      %p91 = scmp.eq.s32.totalorder %s22, 0
      %p92 = por %p90, %p91
      %p93 = scmp.ne.s32.totalorder %s79, %s80
      %p94 = scmp.eq.s32.totalorder %s23, 1
      %p95 = por %p93, %p94
      %p97 = scmp.ne.s32.totalorder %s80, %s96
      %p98 = scmp.eq.s32.totalorder %s23, 0
      %p99 = por %p97, %p98
      %s100 = ssub.s32 %s24, %s43
      %s101 = ssub.s32 %s25, %s39
      %s102 = sor.u32 %s100, %s101
      %p103 = scmp.eq.s32.totalorder %s102, 0
      %s105 = sadd.s32 %s104, 1
      %s106 = scalar_select %p103, %s104, %s105
      %p109 = pneg %p103
      %p110 = scmp.eq.s32.totalorder %s17, 1
      %p111 = por %p109, %p110
      %p112 = scmp.ne.s32.totalorder %s104, %s107
      %p113 = scmp.eq.s32.totalorder %s17, 0
      %p114 = por %p112, %p113
      %p115 = scmp.ne.s32.totalorder %s104, %s107
      %p116 = scmp.eq.s32.totalorder %s22, 1
      %p117 = por %p115, %p116
      %p118 = scmp.ne.s32.totalorder %s107, %s108
      %p119 = scmp.eq.s32.totalorder %s22, 0
      %p120 = por %p118, %p119
      %p121 = scmp.ne.s32.totalorder %s107, %s108
      %p122 = scmp.eq.s32.totalorder %s23, 1
      %p123 = por %p121, %p122
      %p125 = scmp.ne.s32.totalorder %s108, %s124
      %p126 = scmp.eq.s32.totalorder %s23, 0
      %p127 = por %p125, %p126
      %p128 = scmp.le.s32.totalorder 1, %s17
      %p129 = scmp.lt.s32.totalorder %s17, 3
      %p130 = pnand %p128, %p129
      %p131 = pneg %p130
      // Predicated region
      $region9: #{simple_attention.1} parent=5 // pred_check
        _
      $region10: #{simple_attention.1} parent=5 // pred_check_branch
        %133 = sbr.rel (%p130) target = $region12
      $region11: #{simple_attention.1} parent=5 // pred_region
        %s134 = ssub.s32 %s17, 1
      $region12: #{simple_attention.1} parent=5 // pred_fallthru
        _
      %p135 = scmp.lt.s32.totalorder %s17, 2
      // Predicated region
      $region13: #{simple_attention.1} parent=5 // pred_check
        %p136 = pneg %p135
      $region14: #{simple_attention.1} parent=5 // pred_check_branch
        %138 = sbr.rel (%p136) target = $region16
      $region15: #{simple_attention.1} parent=5 // pred_region
        // Predicated region
        $region17: #{simple_attention.1} parent=15 // pred_check
          %p139 = pneg %p58
        $region18: #{simple_attention.1} parent=15 // pred_check_branch
          %141 = sbr.rel (%p139) target = $region20
        $region19: #{simple_attention.1} parent=15 // pred_region
          %s142 = sand.u32 %s48, 1
          %s143 = scalar_lea.sflag [#allocation6], %s142
          %s144 = sand.u32 %s48, 1
          %s145 = smul.addr %s144, 8
          %s146 = scalar_lea.vmem [#allocation5], %s145
          %s148 = ssub.s32 128, 128
          %149 = vsyncadd %s143, %s148
          %s150 = sadd.s32 %s25, %s24
          %s151 = smul.addr %s150, 128
          %s152 = scalar_lea.hbm %s0, %s151
          %s154 = sshll.u32 %s146, 4
          %s155 = int_to_ptr.vmem [resolvable:$true] %s154
          %157 = dma.hbm_to_vmem [thread:$0]  %s152, 128, %s155, %s143
        $region20: #{simple_attention.1} parent=15 // pred_fallthru
          _
        // Predicated region
        $region21: #{simple_attention.1} parent=15 // pred_check
          %p158 = pneg %p86
        $region22: #{simple_attention.1} parent=15 // pred_check_branch
          %160 = sbr.rel (%p158) target = $region24
        $region23: #{simple_attention.1} parent=15 // pred_region
          %s161 = sand.u32 %s76, 1
          %s162 = scalar_lea.sflag [#allocation9], %s161
          %s163 = sand.u32 %s76, 1
          %s164 = smul.addr %s163, 8
          %s165 = scalar_lea.vmem [#allocation8], %s164
          %s167 = ssub.s32 128, 128
          %168 = vsyncadd %s162, %s167
          %s169 = sadd.s32 %s26, %s24
          %s170 = smul.addr %s169, 128
          %s171 = scalar_lea.hbm %s1, %s170
          %s173 = sshll.u32 %s165, 4
          %s174 = int_to_ptr.vmem [resolvable:$true] %s173
          %176 = dma.hbm_to_vmem [thread:$0]  %s171, 128, %s174, %s162
        $region24: #{simple_attention.1} parent=15 // pred_fallthru
          _
      $region16: #{simple_attention.1} parent=5 // pred_fallthru
        _
      %p177 = scmp.le.s32.totalorder 1, %s17
      %p178 = scmp.lt.s32.totalorder %s17, 3
      %p179 = pnand %p177, %p178
      %p180 = pneg %p179
      // Predicated region
      $region25: #{simple_attention.1} parent=5 // pred_check
        _
      $region26: #{simple_attention.1} parent=5 // pred_check_branch
        %182 = sbr.rel (%p179) target = $region28
      $region27: #{simple_attention.1} parent=5 // pred_region
        %s183 = ssub.s32 %s17, 1
        %s184 = sand.u32 %s51, 1
        %s185 = scalar_lea.sflag [#allocation6], %s184
        %s186 = sand.u32 %s51, 1
        %s187 = smul.addr %s186, 8
        %s188 = scalar_lea.vmem [#allocation5], %s187
        // Predicated region
        $region29: #{simple_attention.1} parent=27 // pred_check
          %p189 = pneg %p64
        $region30: #{simple_attention.1} parent=27 // pred_check_branch
          %191 = sbr.rel (%p189) target = $region32
        $region31: #{simple_attention.1} parent=27 // pred_region
          %192 = dma.done %s185, 128
        $region32: #{simple_attention.1} parent=27 // pred_fallthru
          _
        %s193 = sand.u32 %s79, 1
        %s194 = scalar_lea.sflag [#allocation9], %s193
        %s195 = sand.u32 %s79, 1
        %s196 = smul.addr %s195, 8
        %s197 = scalar_lea.vmem [#allocation8], %s196
        // Predicated region
        $region33: #{simple_attention.1} parent=27 // pred_check
          %p198 = pneg %p92
        $region34: #{simple_attention.1} parent=27 // pred_check_branch
          %200 = sbr.rel (%p198) target = $region36
        $region35: #{simple_attention.1} parent=27 // pred_region
          %201 = dma.done %s194, 128
        $region36: #{simple_attention.1} parent=27 // pred_fallthru
          _
        %s202 = sand.u32 %s51, 1
        %s203 = scalar_lea.sflag [#allocation6], %s202
        %s204 = sand.u32 %s51, 1
        %s205 = smul.addr %s204, 8
        %s206 = scalar_lea.vmem [#allocation5], %s205
        %p207 = pneg %p64
        %p208 = pneg %p61
        %s209 = sand.u32 %s79, 1
        %s210 = scalar_lea.sflag [#allocation9], %s209
        %s211 = sand.u32 %s79, 1
        %s212 = smul.addr %s211, 8
        %s213 = scalar_lea.vmem [#allocation8], %s212
        %p214 = pneg %p92
        %p215 = pneg %p89
        %p216 = pneg %p120
        %p217 = pneg %p117
        %s218 = sand.u32 %s107, 1
        %s219 = scalar_lea.sflag [#allocation7], %s218
        %s220 = sand.u32 %s107, 1
        %s221 = smul.addr %s220, 8
        %s222 = scalar_lea.vmem [#allocation10], %s221
        %p223 = scmp.eq.s32.totalorder %s29, 0
        // Predicated region
        $region37: #{simple_attention.1} parent=27 // pred_check
          %p224 = pneg %p223
        $region38: #{simple_attention.1} parent=27 // pred_check_branch
          %226 = sbr.rel (%p224) target = $region40
        $region39: #{simple_attention.1} parent=27 // pred_region
          %vm227 = vcmask 7168
          %228 = vst.msk [vmem:[#allocation2] sm:$0xff] %vm227, -inf
          %229 = vst.msk [vmem:[#allocation3] sm:$0xff] %vm227, 0.0
          %vm230 = vcmask 261120
          %231 = vst.msk [vmem:[#allocation4] sm:$0xff] %vm230, 0.0
        $region40: #{simple_attention.1} parent=27 // pred_fallthru
          _
        %v232 = vld [vmem:[%s188] sm:$0xff]
        %v233 = vld [vmem:[%s197] sm:$0xff]
        %vm234 = vcmask 261120
        %v236 = vsel %vm234, %v232, 0
        %v239 = vsel %vm234, %v233, 0
        %241 = vmatprep.subr.mxu0 0.0
        %242 = vmatpush1.xpose.msra.mxu0 %v239
        %243 = vmatprep.subr.mxu0 0.0
        %244 = vmatpush1.xpose.msra.mxu0 0.0
        %245 = vmatprep.subr.mxu0 0.0
        %246 = vmatpush1.xpose.msra.mxu0 0.0
        %247 = vmatprep.subr.mxu0 0.0
        %248 = vmatpush1.xpose.msra.mxu0 0.0
        %249 = vmatprep.subr.mxu0 0.0
        %250 = vmatpush1.xpose.msra.mxu0 0.0
        %251 = vmatprep.subr.mxu0 0.0
        %252 = vmatpush1.xpose.msra.mxu0 0.0
        %253 = vmatprep.subr.mxu0 0.0
        %254 = vmatpush1.xpose.msra.mxu0 0.0
        %255 = vmatprep.subr.mxu0 0.0
        %256 = vmatpush1.xpose.msra.mxu0 0.0
        %257 = vmatprep.subr.mxu0 0.0
        %258 = vmatpush1.xpose.msra.mxu0 0.0
        %259 = vmatprep.subr.mxu0 0.0
        %260 = vmatpush1.xpose.msra.mxu0 0.0
        %261 = vmatprep.subr.mxu0 0.0
        %262 = vmatpush1.xpose.msra.mxu0 0.0
        %263 = vmatprep.subr.mxu0 0.0
        %264 = vmatpush1.xpose.msra.mxu0 0.0
        %265 = vmatprep.subr.mxu0 0.0
        %266 = vmatpush1.xpose.msra.mxu0 0.0
        %267 = vmatprep.subr.mxu0 0.0
        %268 = vmatpush1.xpose.msra.mxu0 0.0
        %269 = vmatprep.subr.mxu0 0.0
        %270 = vmatpush1.xpose.msra.mxu0 0.0
        %271 = vmatprep.subr.mxu0 0.0
        %272 = vmatpush1.xpose.msra.mxu0 0.0
        %273 = vmatprep.subr.mxu0 0.0
        %274 = vmatpush1.xpose.msra.mxu0 0.0
        %275 = vmatprep.subr.mxu0 0.0
        %276 = vmatpush1.xpose.msra.mxu0 0.0
        %277 = vmatprep.subr.mxu0 0.0
        %278 = vmatpush1.xpose.msra.mxu0 0.0
        %279 = vmatprep.subr.mxu0 0.0
        %280 = vmatpush1.xpose.msra.mxu0 0.0
        %281 = vmatprep.subr.mxu0 0.0
        %282 = vmatpush1.xpose.msra.mxu0 0.0
        %283 = vmatprep.subr.mxu0 0.0
        %284 = vmatpush1.xpose.msra.mxu0 0.0
        %285 = vmatprep.subr.mxu0 0.0
        %286 = vmatpush1.xpose.msra.mxu0 0.0
        %287 = vmatprep.subr.mxu0 0.0
        %288 = vmatpush1.xpose.msra.mxu0 0.0
        %289 = vmatprep.subr.mxu0 0.0
        %290 = vmatpush1.xpose.msra.mxu0 0.0
        %291 = vmatprep.subr.mxu0 0.0
        %292 = vmatpush1.xpose.msra.mxu0 0.0
        %293 = vmatprep.subr.mxu0 0.0
        %294 = vmatpush1.xpose.msra.mxu0 0.0
        %295 = vmatprep.subr.mxu0 0.0
        %296 = vmatpush1.xpose.msra.mxu0 0.0
        %297 = vmatprep.subr.mxu0 0.0
        %298 = vmatpush1.xpose.msra.mxu0 0.0
        %299 = vmatprep.subr.mxu0 0.0
        %300 = vmatpush1.xpose.msra.mxu0 0.0
        %301 = vmatprep.subr.mxu0 0.0
        %302 = vmatpush1.xpose.msra.mxu0 0.0
        %303 = vmatprep.subr.mxu0 0.0
        %304 = vmatpush1.xpose.msra.mxu0 0.0
        %305 = vmatprep.mubr.f32.mxu0 0.0
        %306 = vmatmul.mubr.f32.gmra.mrb[0].mxu0 %v236
        %v307 = vpop.f32.mrb[0].mxu0
        %v308 = vadd.f32 0.0, %v307
        %v309 = vpop.f32.mrb[0].mxu0
        %310 = vdwg.mxu0
        %v311 = vld [vmem:[#allocation2] sm:$0xff]
        %vm312 = vcmask 64512
        %v313 = vsel %vm312, %v308, -inf
        %314 = vmax.xlane.f32.xlu0 %v313
        %v315 = vpop.xlane.xlu0 %314
        %v316 = vmax.f32 %v311, %v315
        %v317 = vsub.f32 %v311, %v316
        %v318 = vmul.f32 %v317, 1.442695
        %v319 = vpow.pop %v318
        %321 = vset.pattern.permute.xlu0 0
        %322 = vperm.xlu0 %321, %v316
        %v323 = vpop.permute.xlu0 %322
        %v325 = vsub.f32 %v308, %v323
        %v326 = vmul.f32 %v325, 1.442695
        %v327 = vpow.pop %v326
        %v328 = vld [vmem:[#allocation3] sm:$0xff]
        %v329 = vmul.f32 %v319, %v328
        %v330 = vsel %vm312, %v327, 0.0
        %331 = vadd.xlane.f32.xlu0 %v330
        %v332 = vpop.xlane.xlu0 %331
        %v333 = vadd.f32 %v329, %v332
        %vm334 = vcmask 7168
        %335 = vst.msk [vmem:[#allocation3] sm:$0xff] %vm334, %v333
        %v336 = vld [vmem:[#allocation4] sm:$0xff]
        %338 = vset.pattern.permute.xlu0 0
        %339 = vperm.xlu0 %338, %v319
        %v340 = vpop.permute.xlu0 %339
        %v342 = vmul.f32 %v340, %v336
        %v344 = vsel %vm312, %v327, 0
        %346 = vmatprep.subr.mxu0 0.0
        %347 = vmatpush1.msra.mxu0 %v233
        %348 = vmatprep.subr.mxu0 0.0
        %349 = vmatpush1.msra.mxu0 0.0
        %350 = vmatprep.subr.mxu0 0.0
        %351 = vmatpush1.msra.mxu0 0.0
        %352 = vmatprep.subr.mxu0 0.0
        %353 = vmatpush1.msra.mxu0 0.0
        %354 = vmatprep.subr.mxu0 0.0
        %355 = vmatpush1.msra.mxu0 0.0
        %356 = vmatprep.subr.mxu0 0.0
        %357 = vmatpush1.msra.mxu0 0.0
        %358 = vmatprep.subr.mxu0 0.0
        %359 = vmatpush1.msra.mxu0 0.0
        %360 = vmatprep.subr.mxu0 0.0
        %361 = vmatpush1.msra.mxu0 0.0
        %362 = vmatprep.subr.mxu0 0.0
        %363 = vmatpush1.msra.mxu0 0.0
        %364 = vmatprep.subr.mxu0 0.0
        %365 = vmatpush1.msra.mxu0 0.0
        %366 = vmatprep.subr.mxu0 0.0
        %367 = vmatpush1.msra.mxu0 0.0
        %368 = vmatprep.subr.mxu0 0.0
        %369 = vmatpush1.msra.mxu0 0.0
        %370 = vmatprep.subr.mxu0 0.0
        %371 = vmatpush1.msra.mxu0 0.0
        %372 = vmatprep.subr.mxu0 0.0
        %373 = vmatpush1.msra.mxu0 0.0
        %374 = vmatprep.subr.mxu0 0.0
        %375 = vmatpush1.msra.mxu0 0.0
        %376 = vmatprep.subr.mxu0 0.0
        %377 = vmatpush1.msra.mxu0 0.0
        %378 = vmatprep.subr.mxu0 0.0
        %379 = vmatpush1.msra.mxu0 0.0
        %380 = vmatprep.subr.mxu0 0.0
        %381 = vmatpush1.msra.mxu0 0.0
        %382 = vmatprep.subr.mxu0 0.0
        %383 = vmatpush1.msra.mxu0 0.0
        %384 = vmatprep.subr.mxu0 0.0
        %385 = vmatpush1.msra.mxu0 0.0
        %386 = vmatprep.subr.mxu0 0.0
        %387 = vmatpush1.msra.mxu0 0.0
        %388 = vmatprep.subr.mxu0 0.0
        %389 = vmatpush1.msra.mxu0 0.0
        %390 = vmatprep.subr.mxu0 0.0
        %391 = vmatpush1.msra.mxu0 0.0
        %392 = vmatprep.subr.mxu0 0.0
        %393 = vmatpush1.msra.mxu0 0.0
        %394 = vmatprep.subr.mxu0 0.0
        %395 = vmatpush1.msra.mxu0 0.0
        %396 = vmatprep.subr.mxu0 0.0
        %397 = vmatpush1.msra.mxu0 0.0
        %398 = vmatprep.subr.mxu0 0.0
        %399 = vmatpush1.msra.mxu0 0.0
        %400 = vmatprep.subr.mxu0 0.0
        %401 = vmatpush1.msra.mxu0 0.0
        %402 = vmatprep.subr.mxu0 0.0
        %403 = vmatpush1.msra.mxu0 0.0
        %404 = vmatprep.subr.mxu0 0.0
        %405 = vmatpush1.msra.mxu0 0.0
        %406 = vmatprep.subr.mxu0 0.0
        %407 = vmatpush1.msra.mxu0 0.0
        %408 = vmatprep.subr.mxu0 0.0
        %409 = vmatpush1.msra.mxu0 0.0
        %410 = vmatprep.mubr.f32.mxu0 0.0
        %411 = vmatmul.mubr.f32.gmra.mrb[0].mxu0 %v344
        %v412 = vpop.f32.mrb[0].mxu0
        %v413 = vadd.f32 0.0, %v412
        %v414 = vpop.f32.mrb[0].mxu0
        %415 = vdwg.mxu0
        %v416 = vadd.f32 %v342, %v413
        %417 = vst.msk [vmem:[#allocation4] sm:$0xff] %vm234, %v416
        %418 = vst.msk [vmem:[#allocation2] sm:$0xff] %vm334, %v316
        // Predicated region
        $region41: #{simple_attention.1} parent=27 // pred_check
          %p419 = pneg %p223
        $region42: #{simple_attention.1} parent=27 // pred_check_branch
          %421 = sbr.rel (%p419) target = $region44
        $region43: #{simple_attention.1} parent=27 // pred_region
          %v422 = vld [vmem:[#allocation4] sm:$0xff]
          %v423 = vld [vmem:[#allocation3] sm:$0xff]
          %425 = vset.pattern.permute.xlu0 0
          %426 = vperm.xlu0 %425, %v423
          %v427 = vpop.permute.xlu0 %426
          %v429 = vrcp.pop %v427
          %v430 = vmul.f32 %v422, %v429
          %431 = vst.msk [vmem:[%s222] sm:$0xff] %vm234, %v430
        $region44: #{simple_attention.1} parent=27 // pred_fallthru
          _
        %s432 = sand.u32 %s107, 1
        %s433 = scalar_lea.sflag [#allocation7], %s432
        %s434 = sand.u32 %s107, 1
        %s435 = smul.addr %s434, 8
        %s436 = scalar_lea.vmem [#allocation10], %s435
        // Predicated region
        $region45: #{simple_attention.1} parent=27 // pred_check
          %p437 = pneg %p117
        $region46: #{simple_attention.1} parent=27 // pred_check_branch
          %439 = sbr.rel (%p437) target = $region48
        $region47: #{simple_attention.1} parent=27 // pred_region
          %s441 = ssub.s32 128, 128
          %442 = vsyncadd %s433, %s441
          %s443 = sadd.s32 %s28, %s27
          %s444 = smul.addr %s443, 128
          %s445 = scalar_lea.hbm %s2, %s444
          %s447 = sshll.u32 %s436, 4
          %s448 = int_to_ptr.vmem [resolvable:$true] %s447
          %450 = dma.vmem_to_hbm [thread:$0]  %s448, 128, %s445, %s433
        $region48: #{simple_attention.1} parent=27 // pred_fallthru
          _
      $region28: #{simple_attention.1} parent=5 // pred_fallthru
        _
      %p451 = scmp.le.s32.totalorder 2, %s17
      // Predicated region
      $region49: #{simple_attention.1} parent=5 // pred_check
        %p452 = pneg %p451
      $region50: #{simple_attention.1} parent=5 // pred_check_branch
        %454 = sbr.rel (%p452) target = $region52
      $region51: #{simple_attention.1} parent=5 // pred_region
        %s455 = ssub.s32 %s17, 2
        // Predicated region
        $region53: #{simple_attention.1} parent=51 // pred_check
          %p456 = pneg %p123
        $region54: #{simple_attention.1} parent=51 // pred_check_branch
          %458 = sbr.rel (%p456) target = $region56
        $region55: #{simple_attention.1} parent=51 // pred_region
          %s459 = sand.u32 %s108, 1
          %s460 = scalar_lea.sflag [#allocation7], %s459
          %s461 = sand.u32 %s108, 1
          %s462 = smul.addr %s461, 8
          %s463 = scalar_lea.vmem [#allocation10], %s462
          %464 = dma.done %s460, 128
        $region56: #{simple_attention.1} parent=51 // pred_fallthru
          _
      $region52: #{simple_attention.1} parent=5 // pred_fallthru
        _
    $region6: #{simple_attention.1} parent=1 // loop_footer
      %s21 = sadd.s32 1, %s17
    $region7: #{simple_attention.1} parent=1 // loop_footer_branch
      %16 = sbr.rel target = $region3
    $region8: #{simple_attention.1} parent=1 // loop_exit
      _
    %465 = vsyncpa [#allocation6], 1
    %s466 = scalar_lea.sflag [#allocation6], 1
    %467 = vsyncpa %s466, 1
    %468 = vsyncpa [#allocation9], 1
    %s469 = scalar_lea.sflag [#allocation9], 1
    %470 = vsyncpa %s469, 1
    %471 = vsyncpa [#allocation7], 1
    %s472 = scalar_lea.sflag [#allocation7], 1
    %473 = vsyncpa %s472, 1

</llo_original>
